<compile_context>
chip_gen: v6e
topology: v6e:2x2x1
jax: 0.10.0
libtpu: 0.0.40
codegen_flags: <defaults>
</compile_context>

<pallas_src>
import jax
import jax.numpy as jnp
from jax import lax
from jax.experimental import pallas as pl
from jax.experimental.pallas import tpu as pltpu


def _round_up(x, m):
    return ((x + m - 1) // m) * m


# 32 MiB scoped VMEM: above v5e's 16 MiB default, equal to v6e/v7x defaults,
# and below physical VMEM on every generation (v7x physical = 64 MiB).
_VMEM_LIMIT_BYTES = 32 * 1024 * 1024

# Contract last dim of x with last dim of weight  ==  x @ W.T  (no transpose op).
_DOT_DIMS = (((1,), (1,)), ((), ()))


# ---------------------------------------------------------------------------
# Kernels
# ---------------------------------------------------------------------------
def _make_fused_kernel(compute_dtype):
    """Whole-K kernel: o = x @ W.T + b in a single MXU pass per block."""
    def kernel(x_ref, w_ref, b_ref, o_ref):
        a = x_ref[...]
        w = w_ref[...]
        if compute_dtype is not None:
            a = a.astype(compute_dtype)
            w = w.astype(compute_dtype)
        acc = lax.dot_general(a, w, _DOT_DIMS, preferred_element_type=jnp.float32)
        o_ref[...] = (acc + b_ref[...].astype(jnp.float32)).astype(o_ref.dtype)
    return kernel


def _make_ksplit_kernel_f32(compute_dtype):
    """K-split kernel, f32 output: accumulate directly into o_ref (no scratch)."""
    def kernel(x_ref, w_ref, b_ref, o_ref):
        k = pl.program_id(2)

        @pl.when(k == 0)
        def _():
            o_ref[...] = jnp.zeros_like(o_ref)

        a = x_ref[...]
        w = w_ref[...]
        if compute_dtype is not None:
            a = a.astype(compute_dtype)
            w = w.astype(compute_dtype)
        o_ref[...] += lax.dot_general(a, w, _DOT_DIMS,
                                      preferred_element_type=jnp.float32)

        @pl.when(k == pl.num_programs(2) - 1)
        def _():
            o_ref[...] += b_ref[...].astype(jnp.float32)
    return kernel


def _make_ksplit_kernel_acc(compute_dtype):
    """K-split kernel, non-f32 output: f32 VMEM accumulator scratch."""
    def kernel(x_ref, w_ref, b_ref, o_ref, acc_ref):
        k = pl.program_id(2)

        @pl.when(k == 0)
        def _():
            acc_ref[...] = jnp.zeros_like(acc_ref)

        a = x_ref[...]
        w = w_ref[...]
        if compute_dtype is not None:
            a = a.astype(compute_dtype)
            w = w.astype(compute_dtype)
        acc_ref[...] += lax.dot_general(a, w, _DOT_DIMS,
                                        preferred_element_type=jnp.float32)

        @pl.when(k == pl.num_programs(2) - 1)
        def _():
            o_ref[...] = (acc_ref[...] + b_ref[...].astype(jnp.float32)
                          ).astype(o_ref.dtype)
    return kernel


# ---------------------------------------------------------------------------
# Wrapper
# ---------------------------------------------------------------------------
def linear_regression_forward(x, weight, bias, *, tm=256, tn=256, tk_cap=2048,
                              small_vmem_budget=12 * 1024 * 1024,
                              compute_dtype=None):
    """Pallas TPU equivalent of nn.Linear(input_dim, output_dim)(x).

    x:      (..., input_dim)
    weight: (output_dim, input_dim)   -- same layout as nn.Linear.weight
    bias:   (output_dim,)
    compute_dtype: optional dtype (e.g. jnp.bfloat16) for the MXU inputs on
                   v6e/v7x; accumulation stays float32.
    returns (..., output_dim)
    """
    orig_shape = x.shape
    din = orig_shape[-1]
    dout, din_w = weight.shape
    assert din == din_w, (din, din_w)
    out_dtype = x.dtype

    x2 = x.reshape(-1, din)
    B = x2.shape[0]
    b2 = bias.reshape(1, dout)

    footprint = (B * din * jnp.dtype(x.dtype).itemsize
                 + dout * din * jnp.dtype(weight.dtype).itemsize
                 + dout * jnp.dtype(bias.dtype).itemsize
                 + B * dout * jnp.dtype(out_dtype).itemsize)

    # ---------------- fast path: everything resident in VMEM, no padding ----
    if footprint <= small_vmem_budget:
        if B >= 16 and B % 16 == 0:
            nm, bm = 2, B // 2     # 2 "parallel" M blocks -> both v7x TCs busy
        else:
            nm, bm = 1, B
        out = pl.pallas_call(
            _make_fused_kernel(compute_dtype),
            out_shape=jax.ShapeDtypeStruct((B, dout), out_dtype),
            grid=(nm,),
            in_specs=[
                pl.BlockSpec((bm, din), lambda i: (i, 0)),
                pl.BlockSpec((dout, din), lambda i: (0, 0)),   # native layout
                pl.BlockSpec((1, dout), lambda i: (0, 0)),
            ],
            out_specs=pl.BlockSpec((bm, dout), lambda i: (i, 0)),
            compiler_params=pltpu.CompilerParams(
                dimension_semantics=("parallel",),
                vmem_limit_bytes=_VMEM_LIMIT_BYTES,
            ),
        )(x2, weight, b2)
        return out.reshape(*orig_shape[:-1], dout)

    # ---------------- tiled path: (M, N, K) grid -----------------------------
    # Collapse K to a single step whenever it fits; otherwise the fewest equal
    # 128-aligned chunks.
    k128 = _round_up(din, 128)
    nk = -(-k128 // tk_cap)
    tk = _round_up(-(-k128 // nk), 128)
    k_pad = nk * tk

    tm_eff = min(tm, _round_up(B, 8))        # clamp tiles to the actual shape
    tn_eff = min(tn, _round_up(dout, 128))   # lane-dense (multiple of 128)
    m_pad = _round_up(B, tm_eff)
    n_pad = _round_up(dout, tn_eff)
    nm = m_pad // tm_eff
    nn = n_pad // tn_eff

    # Thin zero-pads only where actually required (no transpose of the weight).
    x_p = x2 if (m_pad == B and k_pad == din) else jnp.pad(
        x2, ((0, m_pad - B), (0, k_pad - din)))
    w_p = weight if (n_pad == dout and k_pad == din) else jnp.pad(
        weight, ((0, n_pad - dout), (0, k_pad - din)))
    b_p = b2 if n_pad == dout else jnp.pad(b2, ((0, 0), (0, n_pad - dout)))

    if nk == 1:
        kernel = _make_fused_kernel(compute_dtype)
        scratch_shapes = ()
    elif out_dtype == jnp.float32:
        kernel = _make_ksplit_kernel_f32(compute_dtype)   # accumulate in o_ref
        scratch_shapes = ()
    else:
        kernel = _make_ksplit_kernel_acc(compute_dtype)
        scratch_shapes = (pltpu.VMEM((tm_eff, tn_eff), jnp.float32),)

    out_p = pl.pallas_call(
        kernel,
        out_shape=jax.ShapeDtypeStruct((m_pad, n_pad), out_dtype),
        grid=(nm, nn, nk),
        in_specs=[
            pl.BlockSpec((tm_eff, tk), lambda i, j, k: (i, k)),
            pl.BlockSpec((tn_eff, tk), lambda i, j, k: (j, k)),   # (dout, din) tiles
            pl.BlockSpec((1, tn_eff), lambda i, j, k: (0, j)),
        ],
        out_specs=pl.BlockSpec((tm_eff, tn_eff), lambda i, j, k: (i, j)),
        scratch_shapes=scratch_shapes,
        compiler_params=pltpu.CompilerParams(
            dimension_semantics=("parallel", "parallel", "arbitrary"),
            vmem_limit_bytes=_VMEM_LIMIT_BYTES,
        ),
    )(x_p, w_p, b_p)

    out = out_p if (m_pad == B and n_pad == dout) else out_p[:B, :dout]
    return out.reshape(*orig_shape[:-1], dout)


if __name__ == "__main__":
    key = jax.random.PRNGKey(0)

    # --- Small case consistent with LinearRegression(input_dim, output_dim) ---
    batch, input_dim, output_dim = 8, 32, 16
    kx, kw, kb = jax.random.split(key, 3)
    x = jax.random.normal(kx, (batch, input_dim), dtype=jnp.float32)
    bound = 1.0 / (input_dim ** 0.5)
    weight = jax.random.uniform(kw, (output_dim, input_dim),
                                minval=-bound, maxval=bound, dtype=jnp.float32)
    bias = jax.random.uniform(kb, (output_dim,),
                              minval=-bound, maxval=bound, dtype=jnp.float32)

    out = jax.block_until_ready(linear_regression_forward(x, weight, bias))
    ref = x @ weight.T + bias
    assert out.shape == (batch, output_dim)
    assert jnp.allclose(out, ref, atol=1e-5, rtol=1e-5)

    # --- Medium case: fast path with the 2-way batch split ---
    B2, din2, dout2 = 256, 1024, 256
    kx2, kw2, kb2 = jax.random.split(jax.random.PRNGKey(1), 3)
    x2 = jax.random.normal(kx2, (B2, din2), dtype=jnp.float32)
    bnd2 = 1.0 / (din2 ** 0.5)
    w2 = jax.random.uniform(kw2, (dout2, din2), minval=-bnd2, maxval=bnd2,
                            dtype=jnp.float32)
    b2 = jax.random.uniform(kb2, (dout2,), minval=-bnd2, maxval=bnd2,
                            dtype=jnp.float32)
    ref2 = x2 @ w2.T + b2
    out2 = jax.block_until_ready(linear_regression_forward(x2, w2, b2))
    assert jnp.allclose(out2, ref2, atol=1e-4, rtol=1e-4)

    # --- Same problem forced through the tiled grid (nk collapses to 1) ---
    out3 = jax.block_until_ready(
        linear_regression_forward(x2, w2, b2, small_vmem_budget=0))
    assert jnp.allclose(out3, ref2, atol=1e-4, rtol=1e-4)

    # --- Force a real K split to exercise the accumulate-in-output kernel ---
    out3b = jax.block_until_ready(
        linear_regression_forward(x2, w2, b2, small_vmem_budget=0, tk_cap=512))
    assert jnp.allclose(out3b, ref2, atol=1e-4, rtol=1e-4)

    # --- Non-divisible shapes through the tiled path (thin edge padding) ---
    B4, din4, dout4 = 100, 200, 50
    kx4, kw4, kb4 = jax.random.split(jax.random.PRNGKey(2), 3)
    x4 = jax.random.normal(kx4, (B4, din4), dtype=jnp.float32)
    bnd4 = 1.0 / (din4 ** 0.5)
    w4 = jax.random.uniform(kw4, (dout4, din4), minval=-bnd4, maxval=bnd4,
                            dtype=jnp.float32)
    b4 = jax.random.uniform(kb4, (dout4,), minval=-bnd4, maxval=bnd4,
                            dtype=jnp.float32)
    out4 = jax.block_until_ready(
        linear_regression_forward(x4, w4, b4, small_vmem_budget=0))
    ref4 = x4 @ w4.T + b4
    assert jnp.allclose(out4, ref4, atol=1e-4, rtol=1e-4)

    print("KERNEL_OK")
</pallas_src>

<mosaic_0001>
module attributes {stable_mosaic.version = 11 : i64} {
  func.func @kernel(%arg0: i32, %arg1: memref<8x32xf32, #tpu.memory_space<vmem>>, %arg2: memref<16x32xf32, #tpu.memory_space<vmem>>, %arg3: memref<1x16xf32, #tpu.memory_space<vmem>>, %arg4: memref<8x16xf32, #tpu.memory_space<vmem>>) attributes {dimension_semantics = [#tpu.dimension_semantics<parallel>], iteration_bounds = array<i64: 1>, scalar_prefetch = 0 : i64, scratch_operands = 0 : i64, tpu.core_type = #tpu.core_type<tc>, window_params = [{transform_indices = @transform_0, window_bounds = array<i64: 8, 32>}, {pipeline_mode = #tpu.pipeline_mode<synchronous>, transform_indices = @transform_1, window_bounds = array<i64: 16, 32>}, {pipeline_mode = #tpu.pipeline_mode<synchronous>, transform_indices = @transform_2, window_bounds = array<i64: 1, 16>}, {transform_indices = @transform_3, window_bounds = array<i64: 8, 16>}]} {
    %c0 = arith.constant 0 : index
    %c0_0 = arith.constant 0 : index
    %0 = vector.load %arg1[%c0, %c0_0] : memref<8x32xf32, #tpu.memory_space<vmem>>, vector<8x32xf32>
    %c0_1 = arith.constant 0 : index
    %c0_2 = arith.constant 0 : index
    %1 = vector.load %arg2[%c0_1, %c0_2] : memref<16x32xf32, #tpu.memory_space<vmem>>, vector<16x32xf32>
    %cst = arith.constant dense<0.000000e+00> : vector<8x16xf32>
    %2 = tpu.matmul %0, %1, %cst {dimension_numbers = #tpu.dot_dimension_numbers<[1], [1], [0], [0], [0, 0, 1, 0], [], []>} : vector<8x32xf32>, vector<16x32xf32>, vector<8x16xf32> -> vector<8x16xf32>
    %c0_3 = arith.constant 0 : index
    %c0_4 = arith.constant 0 : index
    %3 = vector.load %arg3[%c0_3, %c0_4] : memref<1x16xf32, #tpu.memory_space<vmem>>, vector<1x16xf32>
    %4 = vector.broadcast %3 : vector<1x16xf32> to vector<8x16xf32>
    %5 = arith.addf %2, %4 : vector<8x16xf32>
    %c0_5 = arith.constant 0 : index
    %c0_6 = arith.constant 0 : index
    %6 = vector.load %arg4[%c0_5, %c0_6] : memref<8x16xf32, #tpu.memory_space<vmem>>, vector<8x16xf32>
    tpu.vector_store %arg4[%c0_5, %c0_6], %5 {strides = array<i32>} : memref<8x16xf32, #tpu.memory_space<vmem>>, vector<8x16xf32>,
    return
  }
  func.func @transform_0(%arg0: i32) -> (i32, i32) {
    %c0_i32 = arith.constant 0 : i32
    %c0_i32_0 = arith.constant 0 : i32
    return %arg0, %c0_i32 : i32, i32
  }
  func.func @transform_1(%arg0: i32) -> (i32, i32) {
    %c0_i32 = arith.constant 0 : i32
    %c0_i32_0 = arith.constant 0 : i32
    %c0_i32_1 = arith.constant 0 : i32
    return %c0_i32, %c0_i32_0 : i32, i32
  }
  func.func @transform_2(%arg0: i32) -> (i32, i32) {
    %c0_i32 = arith.constant 0 : i32
    %c0_i32_0 = arith.constant 0 : i32
    %c0_i32_1 = arith.constant 0 : i32
    return %c0_i32, %c0_i32_0 : i32, i32
  }
  func.func @transform_3(%arg0: i32) -> (i32, i32) {
    %c0_i32 = arith.constant 0 : i32
    %c0_i32_0 = arith.constant 0 : i32
    return %arg0, %c0_i32 : i32, i32
  }
}

</mosaic_0001>

<llo_original>
// kernel: tpu_custom_call.1
$region0: #{tpu_custom_call.1}
  #allocation0 [shape = 'u32[]', space=smem, size = 0x4, offset = 0x4, fixed_abs, tag = 'smem constant byte address 0x4 - core index']
  #allocation1 [shape = 'u32[144,128]{1,0:T(1,128)}', space=vmem, size = 0x12000, scoped, tag = 'internal scratch']
  %s0 = inlined_call_operand.hbm [shape: f32[8,32], index: 0, kind: input, shape index: {}]
  %s1 = inlined_call_operand.hbm [shape: f32[16,32], index: 1, kind: input, shape index: {}]
  %s2 = inlined_call_operand.vmem [shape: f32[1,16], index: 2, kind: input, shape index: {}]
  %s3 = inlined_call_operand.hbm [shape: f32[8,16], index: 3, kind: output, shape index: {}]
  %s4 = sld [smem:[#allocation0]]
  $region30: #{tpu_custom_call.1} parent=0
    _
  %s6 = ssub.s32 1, %s4
  %s7 = scalar_select 0, %s6, %s4
  $region1: #{tpu_custom_call.1} parent=0
    #allocation2 [shape = 'u8[4096]{0}', space=vmem, size = 0x1000, scoped, tag = 'input window, operand 0, single buffered']
    #allocation3 [shape = 's32[1]{0}', space=sflag, size = 0x4, scoped, tag = 'scoped memory for tpu_custom_call.1']
    #allocation4 [shape = 's32[1]{0}', space=sflag, size = 0x4, scoped, tag = 'scoped memory for tpu_custom_call.1']
    #allocation5 [shape = 'u8[8192]{0}', space=vmem, size = 0x2000, scoped, tag = 'input window, operand 1, single buffered']
    #allocation6 [shape = 's32[1]{0}', space=sflag, size = 0x4, scoped, tag = 'scoped memory for tpu_custom_call.1']
    #allocation7 [shape = 'u8[4096]{0}', space=vmem, size = 0x1000, scoped, tag = 'output window, operand 0, single buffered']
    %8 = vsyncpa [#allocation3], 0
    %9 = vsyncpa [#allocation6], 0
    %10 = vsyncpa [#allocation4], 0
    // Predicated region
    $region2: #{tpu_custom_call.1} parent=1 // pred_check
      _
    $region3: #{tpu_custom_call.1} parent=1 // pred_check_branch
      %12 = sbr.rel (0) target = $region5
    $region4: #{tpu_custom_call.1} parent=1 // pred_region
      %s14 = ssub.s32 128, 128
      %15 = vsyncadd [#allocation3], %s14
      %s17 = sshll.u32 [#allocation2], 4
      %s18 = int_to_ptr.vmem [resolvable:$true] %s17
      %20 = dma.hbm_to_vmem [thread:$0]  %s0, 128, %s18, [#allocation3]
    $region5: #{tpu_custom_call.1} parent=1 // pred_fallthru
      _
    // Predicated region
    $region6: #{tpu_custom_call.1} parent=1 // pred_check
      _
    $region7: #{tpu_custom_call.1} parent=1 // pred_check_branch
      %22 = sbr.rel (0) target = $region9
    $region8: #{tpu_custom_call.1} parent=1 // pred_region
      %s24 = ssub.s32 256, 256
      %25 = vsyncadd [#allocation6], %s24
      %s26 = sshll.u32 [#allocation5], 4
      %s27 = int_to_ptr.vmem [resolvable:$true] %s26
      %32 = dma.hbm_to_vmem [thread:$0]  %s1, 256, %s27, [#allocation6], 128, 128, 8
    $region9: #{tpu_custom_call.1} parent=1 // pred_fallthru
      _
    // Predicated region
    $region10: #{tpu_custom_call.1} parent=1 // pred_check
      _
    $region11: #{tpu_custom_call.1} parent=1 // pred_check_branch
      %34 = sbr.rel (0) target = $region13
    $region12: #{tpu_custom_call.1} parent=1 // pred_region
      _
    $region13: #{tpu_custom_call.1} parent=1 // pred_fallthru
      _
    // Predicated region
    $region14: #{tpu_custom_call.1} parent=1 // pred_check
      _
    $region15: #{tpu_custom_call.1} parent=1 // pred_check_branch
      %36 = sbr.rel (0) target = $region17
    $region16: #{tpu_custom_call.1} parent=1 // pred_region
      %37 = dma.done [#allocation3], 128
    $region17: #{tpu_custom_call.1} parent=1 // pred_fallthru
      _
    // Predicated region
    $region18: #{tpu_custom_call.1} parent=1 // pred_check
      _
    $region19: #{tpu_custom_call.1} parent=1 // pred_check_branch
      %39 = sbr.rel (0) target = $region21
    $region20: #{tpu_custom_call.1} parent=1 // pred_region
      %40 = dma.done [#allocation6], 256
    $region21: #{tpu_custom_call.1} parent=1 // pred_fallthru
      _
    %v41 = vld [vmem:[#allocation2] sm:$0xff]
    %v42 = vld [vmem:[#allocation5] sm:$0xff]
    %v43 = vld [vmem:[#allocation5 + $0x8] sm:$0xff]
    %v44 = vld [vmem:[%s2] sm:$0x1]
    %v46 = vlaneseq
    %v47 = vshrl.u32 %v46, 7
    %v48 = vsub.s32 0, %v47
    %v49 = vrot.slane %v44, %v48
    %vm51 = vcmask 261120
    %v53 = vsel %vm51, %v41, 0
    %v56 = vsel %vm51, %v42, 0
    %v59 = vsel %vm51, %v43, 0
    %61 = vmatprep.subr.mxu0 0.0
    %62 = vmatpush1.xpose.msra.mxu0 0.0
    %63 = vmatprep.subr.mxu0 0.0
    %64 = vmatpush1.xpose.msra.mxu0 0.0
    %65 = vmatprep.subr.mxu0 0.0
    %66 = vmatpush1.xpose.msra.mxu0 0.0
    %67 = vmatprep.subr.mxu0 0.0
    %68 = vmatpush1.xpose.msra.mxu0 0.0
    %69 = vmatprep.subr.mxu0 0.0
    %70 = vmatpush1.xpose.msra.mxu0 0.0
    %71 = vmatprep.subr.mxu0 0.0
    %72 = vmatpush1.xpose.msra.mxu0 0.0
    %73 = vmatprep.subr.mxu0 0.0
    %74 = vmatpush1.xpose.msra.mxu0 0.0
    %75 = vmatprep.subr.mxu0 0.0
    %76 = vmatpush1.xpose.msra.mxu0 0.0
    %77 = vmatprep.subr.mxu0 0.0
    %78 = vmatpush1.xpose.msra.mxu0 0.0
    %79 = vmatprep.subr.mxu0 0.0
    %80 = vmatpush1.xpose.msra.mxu0 0.0
    %81 = vmatprep.subr.mxu0 0.0
    %82 = vmatpush1.xpose.msra.mxu0 0.0
    %83 = vmatprep.subr.mxu0 0.0
    %84 = vmatpush1.xpose.msra.mxu0 0.0
    %85 = vmatprep.subr.mxu0 0.0
    %86 = vmatpush1.xpose.msra.mxu0 0.0
    %87 = vmatprep.subr.mxu0 0.0
    %88 = vmatpush1.xpose.msra.mxu0 0.0
    %89 = vmatprep.subr.mxu0 0.0
    %90 = vmatpush1.xpose.msra.mxu0 %v59
    %91 = vmatprep.subr.mxu0 0.0
    %92 = vmatpush1.xpose.msra.mxu0 %v56
    %93 = vmatprep.subr.mxu0 0.0
    %94 = vmatpush2.xpose.msra.mxu0 0.0
    %95 = vmatprep.subr.mxu0 0.0
    %96 = vmatpush2.xpose.msra.mxu0 0.0
    %97 = vmatprep.subr.mxu0 0.0
    %98 = vmatpush2.xpose.msra.mxu0 0.0
    %99 = vmatprep.subr.mxu0 0.0
    %100 = vmatpush2.xpose.msra.mxu0 0.0
    %101 = vmatprep.subr.mxu0 0.0
    %102 = vmatpush2.xpose.msra.mxu0 0.0
    %103 = vmatprep.subr.mxu0 0.0
    %104 = vmatpush2.xpose.msra.mxu0 0.0
    %105 = vmatprep.subr.mxu0 0.0
    %106 = vmatpush2.xpose.msra.mxu0 0.0
    %107 = vmatprep.subr.mxu0 0.0
    %108 = vmatpush2.xpose.msra.mxu0 0.0
    %109 = vmatprep.subr.mxu0 0.0
    %110 = vmatpush2.xpose.msra.mxu0 0.0
    %111 = vmatprep.subr.mxu0 0.0
    %112 = vmatpush2.xpose.msra.mxu0 0.0
    %113 = vmatprep.subr.mxu0 0.0
    %114 = vmatpush2.xpose.msra.mxu0 0.0
    %115 = vmatprep.subr.mxu0 0.0
    %116 = vmatpush2.xpose.msra.mxu0 0.0
    %117 = vmatprep.subr.mxu0 0.0
    %118 = vmatpush2.xpose.msra.mxu0 0.0
    %119 = vmatprep.subr.mxu0 0.0
    %120 = vmatpush2.xpose.msra.mxu0 0.0
    %121 = vmatprep.subr.mxu0 0.0
    %122 = vmatpush2.xpose.msra.mxu0 0.0
    %123 = vmatprep.subr.mxu0 0.0
    %124 = vmatpush2.xpose.msra.mxu0 0.0
    %125 = vmatprep.mubr.f32.mxu0 0.0
    %126 = vmatmul.mubr.f32.gmra.mxu0 %v53
    %v127 = vpop.f32.mrf.mxu0
    %v128 = vadd.f32 %v49, %v127
    %v129 = vpop.f32.mrf.mxu0
    %130 = vdwg.mxu0
    %vm131 = vcmask 130048
    %132 = vst.msk [vmem:[#allocation7] sm:$0xff] %vm131, %v128
    // Predicated region
    $region22: #{tpu_custom_call.1} parent=1 // pred_check
      _
    $region23: #{tpu_custom_call.1} parent=1 // pred_check_branch
      %134 = sbr.rel (0) target = $region25
    $region24: #{tpu_custom_call.1} parent=1 // pred_region
      %s136 = ssub.s32 128, 128
      %137 = vsyncadd [#allocation4], %s136
      %s139 = sshll.u32 [#allocation7], 4
      %s140 = int_to_ptr.vmem [resolvable:$true] %s139
      %142 = dma.vmem_to_hbm [thread:$0]  %s140, 128, %s3, [#allocation4]
    $region25: #{tpu_custom_call.1} parent=1 // pred_fallthru
      _
    // Predicated region
    $region26: #{tpu_custom_call.1} parent=1 // pred_check
      _
    $region27: #{tpu_custom_call.1} parent=1 // pred_check_branch
      %144 = sbr.rel (0) target = $region29
    $region28: #{tpu_custom_call.1} parent=1 // pred_region
      %145 = dma.done [#allocation4], 128
    $region29: #{tpu_custom_call.1} parent=1 // pred_fallthru
      _
    %146 = vsyncpa [#allocation3], 1
    %147 = vsyncpa [#allocation6], 1
    %148 = vsyncpa [#allocation4], 1

</llo_original>
